<compile_context>
chip_gen: v5e
topology: v5e:2x2
jax: 0.10.0
libtpu: 0.0.40
codegen_flags: <defaults>
</compile_context>

<pallas_src>
import functools
import math

import jax
import jax.numpy as jnp
from jax.experimental import pallas as pl
from jax.experimental.pallas import tpu as pltpu


def _round_up(x: int, m: int) -> int:
    return ((x + m - 1) // m) * m


def _choose_batch_tile(batch: int, max_tile: int) -> int:
    """128-aligned batch tile; guarantees >=2 grid steps whenever padded batch > 128."""
    b128 = _round_up(max(batch, 1), 128)
    if b128 <= 128:
        return 128
    num_tiles = max(2, -(-b128 // max_tile))          # >=2 so both v7x TCs get work
    return _round_up(-(-b128 // num_tiles), 128)


def _block_diag(a, b):
    m, n = a.shape
    p, q = b.shape
    out = jnp.zeros((m + p, n + q), jnp.float32)
    out = out.at[:m, :n].set(a)
    out = out.at[m:, n:].set(b)
    return out


def _fused_evaluate_kernel(n_layers, num_actions, action_clip, shared_obs, *refs):
    """Fused evaluate() kernel for one batch tile.

    refs layout (shared_obs=True):
      [obs, actions, inv_std, lp_const, W0, b0, ..., W_{L-1}, b_{L-1}, out]
    refs layout (shared_obs=False):
      [obs, critic_obs, actions, inv_std, lp_const, W0, b0, ..., out]
    out is (2, tile_b): row 0 = log_probs, row 1 = values.
    """
    out_ref = refs[-1]
    if shared_obs:
        obs_ref, act_ref, inv_std_ref, lp_const_ref = refs[:4]
        params = refs[4:-1]
        h = obs_ref[...].astype(jnp.float32)
    else:
        obs_ref, cobs_ref, act_ref, inv_std_ref, lp_const_ref = refs[:5]
        params = refs[5:-1]
        h = jnp.concatenate(
            [obs_ref[...].astype(jnp.float32), cobs_ref[...].astype(jnp.float32)],
            axis=-1,
        )

    # One fused (block-diagonal) matmul per layer; weights are VMEM-resident across tiles.
    for li in range(n_layers):                     # static unroll over layers
        w = params[2 * li][...]
        b = params[2 * li + 1][...]
        h = jnp.dot(h, w, preferred_element_type=jnp.float32) + b
        if li < n_layers - 1:                      # ELU (alpha=1) on hidden layers only
            h = jnp.where(h > 0, h, jnp.exp(h) - 1.0)

    # h: (tile_b, num_actions + 1) -> actor mean | critic value.
    mean = jnp.clip(h[:, :num_actions], -action_clip, action_clip)
    value = h[:, num_actions:num_actions + 1]                       # (tile_b, 1)

    a = act_ref[...].astype(jnp.float32)
    z = (a - mean) * inv_std_ref[...]                               # (tile_b, A)
    logp = jnp.sum(-0.5 * z * z + lp_const_ref[...], axis=-1, keepdims=True)  # (tile_b, 1)

    fused = jnp.concatenate([logp, value], axis=-1)                 # (tile_b, 2)
    out_ref[...] = fused.T                                          # one relayout, one lane-dense store


def gr00t_actor_critic_evaluate(
    observations,
    actions,
    actor_params,
    critic_params,
    log_std,
    critic_observations=None,
    action_clip: float = 1.0,
    max_batch_tile: int = 2048,
    stream_dtype=None,          # e.g. jnp.bfloat16 on v6e/v7x to halve streamed HBM bytes
):
    """Fused TPU forward of GR00TActorCritic.evaluate(): returns (log_probs, values, entropy)."""
    shared_obs = critic_observations is None

    obs = jnp.asarray(observations, jnp.float32)
    cobs = obs if shared_obs else jnp.asarray(critic_observations, jnp.float32)
    acts = jnp.asarray(actions, jnp.float32)
    log_std = jnp.asarray(log_std, jnp.float32)

    B, obs_dim = obs.shape
    cobs_dim = cobs.shape[1]
    A = acts.shape[1]

    n_layers = len(actor_params)
    assert len(critic_params) == n_layers, "actor/critic MLP depths must match for layer fusion"

    # ---- batch tiling: 128-aligned, large, >=2 tiles when possible (v7x megacore) ----
    tile_b = min(max_batch_tile, _choose_batch_tile(B, max_batch_tile))
    b_pad = _round_up(B, tile_b)
    num_tiles = b_pad // tile_b
    pad = b_pad - B
    if pad:
        obs = jnp.pad(obs, ((0, pad), (0, 0)))
        acts = jnp.pad(acts, ((0, pad), (0, 0)))
        if not shared_obs:
            cobs = jnp.pad(cobs, ((0, pad), (0, 0)))

    if stream_dtype is not None:
        obs = obs.astype(stream_dtype)
        acts = acts.astype(stream_dtype)
        if not shared_obs:
            cobs = cobs.astype(stream_dtype)

    # ---- hoisted, batch-independent Gaussian terms ----
    inv_std = jnp.exp(-log_std)[None, :]                                   # (1, A)
    lp_const = (-(log_std + 0.5 * math.log(2.0 * math.pi)))[None, :]       # (1, A)
    entropy = jnp.sum(log_std + 0.5 * (1.0 + math.log(2.0 * math.pi)))     # scalar

    # ---- build fused (block-diagonal) weights: one matmul per layer ----
    fused_params = []
    for li in range(n_layers):
        wa, ba = actor_params[li]
        wc, bc = critic_params[li]
        wa = jnp.asarray(wa, jnp.float32)
        ba = jnp.asarray(ba, jnp.float32)
        wc = jnp.asarray(wc, jnp.float32)
        bc = jnp.asarray(bc, jnp.float32)
        if li == 0 and shared_obs:
            w = jnp.concatenate([wa, wc], axis=1)          # (obs_dim, Ha0+Hc0)
        else:
            w = _block_diag(wa, wc)                        # block-diagonal fusion
        b = jnp.concatenate([ba, bc]).reshape(1, -1)       # (1, Ha+Hc), lane-major
        fused_params += [w, b]

    # Grid-invariant specs: weights DMA'd once, VMEM-resident across every batch tile.
    param_specs = [pl.BlockSpec(p.shape, lambda i: (0, 0)) for p in fused_params]

    in_specs = [pl.BlockSpec((tile_b, obs_dim), lambda i: (i, 0))]         # streamed
    inputs = [obs]
    if not shared_obs:
        in_specs.append(pl.BlockSpec((tile_b, cobs_dim), lambda i: (i, 0)))
        inputs.append(cobs)
    in_specs += [
        pl.BlockSpec((tile_b, A), lambda i: (i, 0)),                       # streamed
        pl.BlockSpec((1, A), lambda i: (0, 0)),                            # inv_std (resident)
        pl.BlockSpec((1, A), lambda i: (0, 0)),                            # lp_const (resident)
    ] + param_specs
    inputs += [acts, inv_std, lp_const] + fused_params

    # Single fused output: row 0 = log_probs, row 1 = values. Sublane dim full-extent (2),
    # lane dim a multiple of 128 -> unmasked lane-dense stores.
    out_shape = jax.ShapeDtypeStruct((2, b_pad), jnp.float32)
    out_specs = pl.BlockSpec((2, tile_b), lambda i: (0, i))

    kernel = functools.partial(
        _fused_evaluate_kernel, n_layers, A, float(action_clip), shared_obs
    )

    out2d = pl.pallas_call(
        kernel,
        out_shape=out_shape,
        grid=(num_tiles,),
        in_specs=in_specs,
        out_specs=out_specs,
        compiler_params=pltpu.CompilerParams(
            dimension_semantics=("parallel",),        # shard batch tiles across TCs (v7x)
        ),
    )(*inputs)

    log_probs = out2d[0, :B]
    values = out2d[1, :B]
    return log_probs, values, entropy


# ----------------------------- pure-JAX reference ------------------------------------
def _reference_evaluate(obs, acts, actor_params, critic_params, log_std,
                        critic_obs=None, action_clip=1.0):
    def mlp(x, params):
        h = x
        for i, (w, b) in enumerate(params):
            h = h @ w + b
            if i < len(params) - 1:
                h = jax.nn.elu(h)
        return h

    mean = jnp.clip(mlp(obs, actor_params), -action_clip, action_clip)
    logp = -0.5 * ((acts - mean) / jnp.exp(log_std)) ** 2 - log_std - 0.5 * math.log(2.0 * math.pi)
    log_probs = logp.sum(-1)
    cobs = obs if critic_obs is None else critic_obs
    values = mlp(cobs, critic_params)[:, 0]
    ent = 0.5 + 0.5 * math.log(2.0 * math.pi) + log_std          # per-dim Normal entropy
    entropy = jnp.broadcast_to(ent.sum(), (obs.shape[0],)).mean()
    return log_probs, values, entropy


def _make_mlp_params(key, in_dim, hidden_dims, out_dim):
    dims = [in_dim] + list(hidden_dims) + [out_dim]
    params = []
    for i in range(len(dims) - 1):
        key, kw, kb = jax.random.split(key, 3)
        bound = 1.0 / math.sqrt(dims[i])
        w = jax.random.uniform(kw, (dims[i], dims[i + 1]), jnp.float32, -bound, bound)
        b = jax.random.uniform(kb, (dims[i + 1],), jnp.float32, -bound, bound)
        params.append((w, b))
    return key, params


if __name__ == "__main__":
    key = jax.random.PRNGKey(0)

    # Small shapes consistent with the module (MLP fallback path, use_gr00t=False).
    batch = 64
    num_actor_obs = 24
    num_critic_obs = 24            # shared obs -> critic_observations=None in evaluate()
    num_actions = 8
    actor_hidden_dims = [64, 64, 64]
    critic_hidden_dims = [64, 64, 64]   # fused hidden layers -> lane-dense 128-wide matmuls
    init_noise_std = 1.0
    action_clip = 1.0

    key, actor_params = _make_mlp_params(key, num_actor_obs, actor_hidden_dims, num_actions)
    key, critic_params = _make_mlp_params(key, num_critic_obs, critic_hidden_dims, 1)

    key, k_obs, k_act = jax.random.split(key, 3)
    observations = jax.random.normal(k_obs, (batch, num_actor_obs), jnp.float32)
    actions = jax.random.normal(k_act, (batch, num_actions), jnp.float32)
    log_std = jnp.full((num_actions,), math.log(init_noise_std), jnp.float32)

    # ---- case 1: shared observations (obs streamed once) ----
    log_probs, values, entropy = gr00t_actor_critic_evaluate(
        observations, actions, actor_params, critic_params, log_std,
        critic_observations=None, action_clip=action_clip)
    log_probs, values, entropy = jax.block_until_ready((log_probs, values, entropy))

    ref_lp, ref_v, ref_e = _reference_evaluate(
        observations, actions, actor_params, critic_params, log_std,
        critic_obs=None, action_clip=action_clip)

    err_lp = float(jnp.max(jnp.abs(log_probs - ref_lp)))
    err_v = float(jnp.max(jnp.abs(values - ref_v)))
    err_e = float(jnp.abs(entropy - ref_e))
    assert log_probs.shape == (batch,) and values.shape == (batch,)
    assert err_lp < 5e-2 and err_v < 5e-2 and err_e < 1e-4, (err_lp, err_v, err_e)

    # ---- case 2: separate critic observations + multi-tile batch (padding / grid path) ----
    batch2, num_critic_obs2 = 300, 32
    key, k_obs2, k_cobs2, k_act2 = jax.random.split(key, 4)
    obs2 = jax.random.normal(k_obs2, (batch2, num_actor_obs), jnp.float32)
    cobs2 = jax.random.normal(k_cobs2, (batch2, num_critic_obs2), jnp.float32)
    acts2 = jax.random.normal(k_act2, (batch2, num_actions), jnp.float32)
    key, critic_params2 = _make_mlp_params(key, num_critic_obs2, critic_hidden_dims, 1)

    lp2, v2, e2 = gr00t_actor_critic_evaluate(
        obs2, acts2, actor_params, critic_params2, log_std,
        critic_observations=cobs2, action_clip=action_clip)
    lp2, v2, e2 = jax.block_until_ready((lp2, v2, e2))
    rlp2, rv2, re2 = _reference_evaluate(
        obs2, acts2, actor_params, critic_params2, log_std,
        critic_obs=cobs2, action_clip=action_clip)
    assert lp2.shape == (batch2,) and v2.shape == (batch2,)
    assert float(jnp.max(jnp.abs(lp2 - rlp2))) < 5e-2
    assert float(jnp.max(jnp.abs(v2 - rv2))) < 5e-2
    assert float(jnp.abs(e2 - re2)) < 1e-4

    print("KERNEL_OK")
</pallas_src>

<mosaic_0001>
module attributes {stable_mosaic.version = 11 : i64} {
  func.func @_fused_evaluate_kernel(%arg0: i32, %arg1: memref<128x24xf32, #tpu.memory_space<vmem>>, %arg2: memref<128x8xf32, #tpu.memory_space<vmem>>, %arg3: memref<1x8xf32, #tpu.memory_space<vmem>>, %arg4: memref<1x8xf32, #tpu.memory_space<vmem>>, %arg5: memref<24x128xf32, #tpu.memory_space<vmem>>, %arg6: memref<1x128xf32, #tpu.memory_space<vmem>>, %arg7: memref<128x128xf32, #tpu.memory_space<vmem>>, %arg8: memref<1x128xf32, #tpu.memory_space<vmem>>, %arg9: memref<128x128xf32, #tpu.memory_space<vmem>>, %arg10: memref<1x128xf32, #tpu.memory_space<vmem>>, %arg11: memref<128x9xf32, #tpu.memory_space<vmem>>, %arg12: memref<1x9xf32, #tpu.memory_space<vmem>>, %arg13: memref<2x128xf32, #tpu.memory_space<vmem>>) attributes {dimension_semantics = [#tpu.dimension_semantics<parallel>], iteration_bounds = array<i64: 1>, scalar_prefetch = 0 : i64, scratch_operands = 0 : i64, tpu.core_type = #tpu.core_type<tc>, window_params = [{transform_indices = @transform_0, window_bounds = array<i64: 128, 24>}, {transform_indices = @transform_1, window_bounds = array<i64: 128, 8>}, {pipeline_mode = #tpu.pipeline_mode<synchronous>, transform_indices = @transform_2, window_bounds = array<i64: 1, 8>}, {pipeline_mode = #tpu.pipeline_mode<synchronous>, transform_indices = @transform_3, window_bounds = array<i64: 1, 8>}, {pipeline_mode = #tpu.pipeline_mode<synchronous>, transform_indices = @transform_4, window_bounds = array<i64: 24, 128>}, {pipeline_mode = #tpu.pipeline_mode<synchronous>, transform_indices = @transform_5, window_bounds = array<i64: 1, 128>}, {pipeline_mode = #tpu.pipeline_mode<synchronous>, transform_indices = @transform_6, window_bounds = array<i64: 128, 128>}, {pipeline_mode = #tpu.pipeline_mode<synchronous>, transform_indices = @transform_7, window_bounds = array<i64: 1, 128>}, {pipeline_mode = #tpu.pipeline_mode<synchronous>, transform_indices = @transform_8, window_bounds = array<i64: 128, 128>}, {pipeline_mode = #tpu.pipeline_mode<synchronous>, transform_indices = @transform_9, window_bounds = array<i64: 1, 128>}, {pipeline_mode = #tpu.pipeline_mode<synchronous>, transform_indices = @transform_10, window_bounds = array<i64: 128, 9>}, {pipeline_mode = #tpu.pipeline_mode<synchronous>, transform_indices = @transform_11, window_bounds = array<i64: 1, 9>}, {transform_indices = @transform_12, window_bounds = array<i64: 2, 128>}]} {
    %c0 = arith.constant 0 : index
    %c0_0 = arith.constant 0 : index
    %0 = vector.load %arg1[%c0, %c0_0] : memref<128x24xf32, #tpu.memory_space<vmem>>, vector<128x24xf32>
    %c0_1 = arith.constant 0 : index
    %c0_2 = arith.constant 0 : index
    %1 = vector.load %arg5[%c0_1, %c0_2] : memref<24x128xf32, #tpu.memory_space<vmem>>, vector<24x128xf32>
    %c0_3 = arith.constant 0 : index
    %c0_4 = arith.constant 0 : index
    %2 = vector.load %arg6[%c0_3, %c0_4] : memref<1x128xf32, #tpu.memory_space<vmem>>, vector<1x128xf32>
    %cst = arith.constant dense<0.000000e+00> : vector<128x128xf32>
    %3 = tpu.matmul %0, %1, %cst {dimension_numbers = #tpu.dot_dimension_numbers<[1], [0], [0], [1], [0, 0, 1, 1], [], []>} : vector<128x24xf32>, vector<24x128xf32>, vector<128x128xf32> -> vector<128x128xf32>
    %4 = vector.broadcast %2 : vector<1x128xf32> to vector<128x128xf32>
    %5 = arith.addf %3, %4 : vector<128x128xf32>
    %cst_5 = arith.constant 0.000000e+00 : f32
    %6 = vector.broadcast %cst_5 : f32 to vector<128x128xf32>
    %7 = arith.cmpf ogt, %5, %6 : vector<128x128xf32>
    %8 = math.exp %5 : vector<128x128xf32>
    %cst_6 = arith.constant 1.000000e+00 : f32
    %9 = vector.broadcast %cst_6 : f32 to vector<128x128xf32>
    %10 = arith.subf %8, %9 : vector<128x128xf32>
    %11 = arith.select %7, %5, %10 : vector<128x128xi1>, vector<128x128xf32>
    %c0_7 = arith.constant 0 : index
    %c0_8 = arith.constant 0 : index
    %12 = vector.load %arg7[%c0_7, %c0_8] : memref<128x128xf32, #tpu.memory_space<vmem>>, vector<128x128xf32>
    %c0_9 = arith.constant 0 : index
    %c0_10 = arith.constant 0 : index
    %13 = vector.load %arg8[%c0_9, %c0_10] : memref<1x128xf32, #tpu.memory_space<vmem>>, vector<1x128xf32>
    %cst_11 = arith.constant dense<0.000000e+00> : vector<128x128xf32>
    %14 = tpu.matmul %11, %12, %cst_11 {dimension_numbers = #tpu.dot_dimension_numbers<[1], [0], [0], [1], [0, 0, 1, 1], [], []>} : vector<128x128xf32>, vector<128x128xf32>, vector<128x128xf32> -> vector<128x128xf32>
    %15 = vector.broadcast %13 : vector<1x128xf32> to vector<128x128xf32>
    %16 = arith.addf %14, %15 : vector<128x128xf32>
    %cst_12 = arith.constant 0.000000e+00 : f32
    %17 = vector.broadcast %cst_12 : f32 to vector<128x128xf32>
    %18 = arith.cmpf ogt, %16, %17 : vector<128x128xf32>
    %19 = math.exp %16 : vector<128x128xf32>
    %cst_13 = arith.constant 1.000000e+00 : f32
    %20 = vector.broadcast %cst_13 : f32 to vector<128x128xf32>
    %21 = arith.subf %19, %20 : vector<128x128xf32>
    %22 = arith.select %18, %16, %21 : vector<128x128xi1>, vector<128x128xf32>
    %c0_14 = arith.constant 0 : index
    %c0_15 = arith.constant 0 : index
    %23 = vector.load %arg9[%c0_14, %c0_15] : memref<128x128xf32, #tpu.memory_space<vmem>>, vector<128x128xf32>
    %c0_16 = arith.constant 0 : index
    %c0_17 = arith.constant 0 : index
    %24 = vector.load %arg10[%c0_16, %c0_17] : memref<1x128xf32, #tpu.memory_space<vmem>>, vector<1x128xf32>
    %cst_18 = arith.constant dense<0.000000e+00> : vector<128x128xf32>
    %25 = tpu.matmul %22, %23, %cst_18 {dimension_numbers = #tpu.dot_dimension_numbers<[1], [0], [0], [1], [0, 0, 1, 1], [], []>} : vector<128x128xf32>, vector<128x128xf32>, vector<128x128xf32> -> vector<128x128xf32>
    %26 = vector.broadcast %24 : vector<1x128xf32> to vector<128x128xf32>
    %27 = arith.addf %25, %26 : vector<128x128xf32>
    %cst_19 = arith.constant 0.000000e+00 : f32
    %28 = vector.broadcast %cst_19 : f32 to vector<128x128xf32>
    %29 = arith.cmpf ogt, %27, %28 : vector<128x128xf32>
    %30 = math.exp %27 : vector<128x128xf32>
    %cst_20 = arith.constant 1.000000e+00 : f32
    %31 = vector.broadcast %cst_20 : f32 to vector<128x128xf32>
    %32 = arith.subf %30, %31 : vector<128x128xf32>
    %33 = arith.select %29, %27, %32 : vector<128x128xi1>, vector<128x128xf32>
    %c0_21 = arith.constant 0 : index
    %c0_22 = arith.constant 0 : index
    %34 = vector.load %arg11[%c0_21, %c0_22] : memref<128x9xf32, #tpu.memory_space<vmem>>, vector<128x9xf32>
    %c0_23 = arith.constant 0 : index
    %c0_24 = arith.constant 0 : index
    %35 = vector.load %arg12[%c0_23, %c0_24] : memref<1x9xf32, #tpu.memory_space<vmem>>, vector<1x9xf32>
    %cst_25 = arith.constant dense<0.000000e+00> : vector<128x9xf32>
    %36 = tpu.matmul %33, %34, %cst_25 {dimension_numbers = #tpu.dot_dimension_numbers<[1], [0], [0], [1], [0, 0, 1, 1], [], []>} : vector<128x128xf32>, vector<128x9xf32>, vector<128x9xf32> -> vector<128x9xf32>
    %37 = vector.broadcast %35 : vector<1x9xf32> to vector<128x9xf32>
    %38 = arith.addf %36, %37 : vector<128x9xf32>
    %39 = vector.extract_strided_slice %38 {offsets = [0, 0], sizes = [128, 8], strides = [1, 1]} : vector<128x9xf32> to vector<128x8xf32>
    %cst_26 = arith.constant -1.000000e+00 : f32
    %cst_27 = arith.constant 1.000000e+00 : f32
    %40 = vector.broadcast %cst_26 : f32 to vector<128x8xf32>
    %41 = arith.maximumf %40, %39 : vector<128x8xf32>
    %42 = vector.broadcast %cst_27 : f32 to vector<128x8xf32>
    %43 = arith.minimumf %42, %41 : vector<128x8xf32>
    %44 = vector.extract_strided_slice %38 {offsets = [0, 8], sizes = [128, 1], strides = [1, 1]} : vector<128x9xf32> to vector<128x1xf32>
    %c0_28 = arith.constant 0 : index
    %c0_29 = arith.constant 0 : index
    %45 = vector.load %arg2[%c0_28, %c0_29] : memref<128x8xf32, #tpu.memory_space<vmem>>, vector<128x8xf32>
    %46 = arith.subf %45, %43 : vector<128x8xf32>
    %c0_30 = arith.constant 0 : index
    %c0_31 = arith.constant 0 : index
    %47 = vector.load %arg3[%c0_30, %c0_31] : memref<1x8xf32, #tpu.memory_space<vmem>>, vector<1x8xf32>
    %48 = vector.broadcast %47 : vector<1x8xf32> to vector<128x8xf32>
    %49 = arith.mulf %46, %48 : vector<128x8xf32>
    %cst_32 = arith.constant -5.000000e-01 : f32
    %50 = vector.broadcast %cst_32 : f32 to vector<128x8xf32>
    %51 = arith.mulf %50, %49 : vector<128x8xf32>
    %52 = arith.mulf %51, %49 : vector<128x8xf32>
    %c0_33 = arith.constant 0 : index
    %c0_34 = arith.constant 0 : index
    %53 = vector.load %arg4[%c0_33, %c0_34] : memref<1x8xf32, #tpu.memory_space<vmem>>, vector<1x8xf32>
    %54 = vector.broadcast %53 : vector<1x8xf32> to vector<128x8xf32>
    %55 = arith.addf %52, %54 : vector<128x8xf32>
    %cst_35 = arith.constant dense<0.000000e+00> : vector<128xf32>
    %56 = vector.multi_reduction <add>, %55, %cst_35 [1] : vector<128x8xf32> to vector<128xf32>
    %57 = vector.shape_cast %56 : vector<128xf32> to vector<128x1xf32>
    %58 = tpu.concatenate %57, %44 in 1 : vector<128x1xf32>, vector<128x1xf32> -> vector<128x2xf32>
    %59 = tpu.transpose %58, [1, 0] : vector<128x2xf32> -> vector<2x128xf32>
    %c0_36 = arith.constant 0 : index
    %c0_37 = arith.constant 0 : index
    %60 = vector.load %arg13[%c0_36, %c0_37] : memref<2x128xf32, #tpu.memory_space<vmem>>, vector<2x128xf32>
    tpu.vector_store %arg13[%c0_36, %c0_37], %59 {strides = array<i32>} : memref<2x128xf32, #tpu.memory_space<vmem>>, vector<2x128xf32>,
    return
  }
  func.func @transform_0(%arg0: i32) -> (i32, i32) {
    %c0_i32 = arith.constant 0 : i32
    %c0_i32_0 = arith.constant 0 : i32
    return %arg0, %c0_i32 : i32, i32
  }
  func.func @transform_1(%arg0: i32) -> (i32, i32) {
    %c0_i32 = arith.constant 0 : i32
    %c0_i32_0 = arith.constant 0 : i32
    return %arg0, %c0_i32 : i32, i32
  }
  func.func @transform_2(%arg0: i32) -> (i32, i32) {
    %c0_i32 = arith.constant 0 : i32
    %c0_i32_0 = arith.constant 0 : i32
    %c0_i32_1 = arith.constant 0 : i32
    return %c0_i32, %c0_i32_0 : i32, i32
  }
  func.func @transform_3(%arg0: i32) -> (i32, i32) {
    %c0_i32 = arith.constant 0 : i32
    %c0_i32_0 = arith.constant 0 : i32
    %c0_i32_1 = arith.constant 0 : i32
    return %c0_i32, %c0_i32_0 : i32, i32
  }
  func.func @transform_4(%arg0: i32) -> (i32, i32) {
    %c0_i32 = arith.constant 0 : i32
    %c0_i32_0 = arith.constant 0 : i32
    %c0_i32_1 = arith.constant 0 : i32
    return %c0_i32, %c0_i32_0 : i32, i32
  }
  func.func @transform_5(%arg0: i32) -> (i32, i32) {
    %c0_i32 = arith.constant 0 : i32
    %c0_i32_0 = arith.constant 0 : i32
    %c0_i32_1 = arith.constant 0 : i32
    return %c0_i32, %c0_i32_0 : i32, i32
  }
  func.func @transform_6(%arg0: i32) -> (i32, i32) {
    %c0_i32 = arith.constant 0 : i32
    %c0_i32_0 = arith.constant 0 : i32
    %c0_i32_1 = arith.constant 0 : i32
    return %c0_i32, %c0_i32_0 : i32, i32
  }
  func.func @transform_7(%arg0: i32) -> (i32, i32) {
    %c0_i32 = arith.constant 0 : i32
    %c0_i32_0 = arith.constant 0 : i32
    %c0_i32_1 = arith.constant 0 : i32
    return %c0_i32, %c0_i32_0 : i32, i32
  }
  func.func @transform_8(%arg0: i32) -> (i32, i32) {
    %c0_i32 = arith.constant 0 : i32
    %c0_i32_0 = arith.constant 0 : i32
    %c0_i32_1 = arith.constant 0 : i32
    return %c0_i32, %c0_i32_0 : i32, i32
  }
  func.func @transform_9(%arg0: i32) -> (i32, i32) {
    %c0_i32 = arith.constant 0 : i32
    %c0_i32_0 = arith.constant 0 : i32
    %c0_i32_1 = arith.constant 0 : i32
    return %c0_i32, %c0_i32_0 : i32, i32
  }
  func.func @transform_10(%arg0: i32) -> (i32, i32) {
    %c0_i32 = arith.constant 0 : i32
    %c0_i32_0 = arith.constant 0 : i32
    %c0_i32_1 = arith.constant 0 : i32
    return %c0_i32, %c0_i32_0 : i32, i32
  }
  func.func @transform_11(%arg0: i32) -> (i32, i32) {
    %c0_i32 = arith.constant 0 : i32
    %c0_i32_0 = arith.constant 0 : i32
    %c0_i32_1 = arith.constant 0 : i32
    return %c0_i32, %c0_i32_0 : i32, i32
  }
  func.func @transform_12(%arg0: i32) -> (i32, i32) {
    %c0_i32 = arith.constant 0 : i32
    %c0_i32_0 = arith.constant 0 : i32
    return %c0_i32, %arg0 : i32, i32
  }
}

</mosaic_0001>

<llo_original>
// kernel: tpu_custom_call.1
$region0: #{tpu_custom_call.1}
  #allocation0 [shape = 'u32[]', space=smem, size = 0x4, offset = 0x4, fixed_abs, tag = 'smem constant byte address 0x4 - core index']
  #allocation1 [shape = 'u32[72,128]{1,0:T(1,128)}', space=vmem, size = 0x9000, scoped, tag = 'internal scratch']
  %s0 = inlined_call_operand.vmem [shape: f32[128,24], index: 0, kind: input, shape index: {}]
  %s1 = inlined_call_operand.vmem [shape: f32[128,8], index: 1, kind: input, shape index: {}]
  %s2 = inlined_call_operand.vmem [shape: f32[1,8], index: 2, kind: input, shape index: {}]
  %s3 = inlined_call_operand.vmem [shape: f32[1,8], index: 3, kind: input, shape index: {}]
  %s4 = inlined_call_operand.vmem [shape: f32[24,128], index: 4, kind: input, shape index: {}]
  %s5 = inlined_call_operand.vmem [shape: f32[1,128], index: 5, kind: input, shape index: {}]
  %s6 = inlined_call_operand.vmem [shape: f32[128,128], index: 6, kind: input, shape index: {}]
  %s7 = inlined_call_operand.vmem [shape: f32[1,128], index: 7, kind: input, shape index: {}]
  %s8 = inlined_call_operand.vmem [shape: f32[128,128], index: 8, kind: input, shape index: {}]
  %s9 = inlined_call_operand.vmem [shape: f32[1,128], index: 9, kind: input, shape index: {}]
  %s10 = inlined_call_operand.vmem [shape: f32[128,9], index: 10, kind: input, shape index: {}]
  %s11 = inlined_call_operand.vmem [shape: f32[1,9], index: 11, kind: input, shape index: {}]
  %s12 = inlined_call_operand.hbm [shape: f32[2,128], index: 12, kind: output, shape index: {}]
  %s13 = sld [smem:[#allocation0]]
  $region58: #{tpu_custom_call.1} parent=0
    _
  %s15 = ssub.s32 1, %s13
  %s16 = scalar_select 0, %s15, %s13
  $region1: #{tpu_custom_call.1} parent=0
    #allocation2 [shape = 'u8[1024]{0}', space=vmem, size = 0x400, scoped, tag = 'output window, operand 0, single buffered']
    #allocation3 [shape = 's32[1]{0}', space=sflag, size = 0x4, scoped, tag = 'scoped memory for tpu_custom_call.1']
    %17 = vsyncpa [#allocation3], 0
    // Predicated region
    $region2: #{tpu_custom_call.1} parent=1 // pred_check
      _
    $region3: #{tpu_custom_call.1} parent=1 // pred_check_branch
      %19 = sbr.rel (0) target = $region5
    $region4: #{tpu_custom_call.1} parent=1 // pred_region
      _
    $region5: #{tpu_custom_call.1} parent=1 // pred_fallthru
      _
    // Predicated region
    $region6: #{tpu_custom_call.1} parent=1 // pred_check
      _
    $region7: #{tpu_custom_call.1} parent=1 // pred_check_branch
      %21 = sbr.rel (0) target = $region9
    $region8: #{tpu_custom_call.1} parent=1 // pred_region
      _
    $region9: #{tpu_custom_call.1} parent=1 // pred_fallthru
      _
    // Predicated region
    $region10: #{tpu_custom_call.1} parent=1 // pred_check
      _
    $region11: #{tpu_custom_call.1} parent=1 // pred_check_branch
      %23 = sbr.rel (0) target = $region13
    $region12: #{tpu_custom_call.1} parent=1 // pred_region
      _
    $region13: #{tpu_custom_call.1} parent=1 // pred_fallthru
      _
    // Predicated region
    $region14: #{tpu_custom_call.1} parent=1 // pred_check
      _
    $region15: #{tpu_custom_call.1} parent=1 // pred_check_branch
      %25 = sbr.rel (0) target = $region17
    $region16: #{tpu_custom_call.1} parent=1 // pred_region
      _
    $region17: #{tpu_custom_call.1} parent=1 // pred_fallthru
      _
    // Predicated region
    $region18: #{tpu_custom_call.1} parent=1 // pred_check
      _
    $region19: #{tpu_custom_call.1} parent=1 // pred_check_branch
      %27 = sbr.rel (0) target = $region21
    $region20: #{tpu_custom_call.1} parent=1 // pred_region
      _
    $region21: #{tpu_custom_call.1} parent=1 // pred_fallthru
      _
    // Predicated region
    $region22: #{tpu_custom_call.1} parent=1 // pred_check
      _
    $region23: #{tpu_custom_call.1} parent=1 // pred_check_branch
      %29 = sbr.rel (0) target = $region25
    $region24: #{tpu_custom_call.1} parent=1 // pred_region
      _
    $region25: #{tpu_custom_call.1} parent=1 // pred_fallthru
      _
    // Predicated region
    $region26: #{tpu_custom_call.1} parent=1 // pred_check
      _
    $region27: #{tpu_custom_call.1} parent=1 // pred_check_branch
      %31 = sbr.rel (0) target = $region29
    $region28: #{tpu_custom_call.1} parent=1 // pred_region
      _
    $region29: #{tpu_custom_call.1} parent=1 // pred_fallthru
      _
    // Predicated region
    $region30: #{tpu_custom_call.1} parent=1 // pred_check
      _
    $region31: #{tpu_custom_call.1} parent=1 // pred_check_branch
      %33 = sbr.rel (0) target = $region33
    $region32: #{tpu_custom_call.1} parent=1 // pred_region
      _
    $region33: #{tpu_custom_call.1} parent=1 // pred_fallthru
      _
    // Predicated region
    $region34: #{tpu_custom_call.1} parent=1 // pred_check
      _
    $region35: #{tpu_custom_call.1} parent=1 // pred_check_branch
      %35 = sbr.rel (0) target = $region37
    $region36: #{tpu_custom_call.1} parent=1 // pred_region
      _
    $region37: #{tpu_custom_call.1} parent=1 // pred_fallthru
      _
    // Predicated region
    $region38: #{tpu_custom_call.1} parent=1 // pred_check
      _
    $region39: #{tpu_custom_call.1} parent=1 // pred_check_branch
      %37 = sbr.rel (0) target = $region41
    $region40: #{tpu_custom_call.1} parent=1 // pred_region
      _
    $region41: #{tpu_custom_call.1} parent=1 // pred_fallthru
      _
    // Predicated region
    $region42: #{tpu_custom_call.1} parent=1 // pred_check
      _
    $region43: #{tpu_custom_call.1} parent=1 // pred_check_branch
      %39 = sbr.rel (0) target = $region45
    $region44: #{tpu_custom_call.1} parent=1 // pred_region
      _
    $region45: #{tpu_custom_call.1} parent=1 // pred_fallthru
      _
    // Predicated region
    $region46: #{tpu_custom_call.1} parent=1 // pred_check
      _
    $region47: #{tpu_custom_call.1} parent=1 // pred_check_branch
      %41 = sbr.rel (0) target = $region49
    $region48: #{tpu_custom_call.1} parent=1 // pred_region
      _
    $region49: #{tpu_custom_call.1} parent=1 // pred_fallthru
      _
    %v42 = vld [vmem:[%s0] sm:$0xff]
    %v43 = vld [vmem:[%s0 + $0x8] sm:$0xff]
    %v44 = vld [vmem:[%s0 + $0x10] sm:$0xff]
    %v45 = vld [vmem:[%s0 + $0x18] sm:$0xff]
    %v46 = vld [vmem:[%s0 + $0x20] sm:$0xff]
    %v47 = vld [vmem:[%s0 + $0x28] sm:$0xff]
    %v48 = vld [vmem:[%s0 + $0x30] sm:$0xff]
    %v49 = vld [vmem:[%s0 + $0x38] sm:$0xff]
    %v50 = vld [vmem:[%s0 + $0x40] sm:$0xff]
    %v51 = vld [vmem:[%s0 + $0x48] sm:$0xff]
    %v52 = vld [vmem:[%s0 + $0x50] sm:$0xff]
    %v53 = vld [vmem:[%s0 + $0x58] sm:$0xff]
    %v54 = vld [vmem:[%s0 + $0x60] sm:$0xff]
    %v55 = vld [vmem:[%s0 + $0x68] sm:$0xff]
    %v56 = vld [vmem:[%s0 + $0x70] sm:$0xff]
    %v57 = vld [vmem:[%s0 + $0x78] sm:$0xff]
    %v58 = vld [vmem:[%s4] sm:$0xff]
    %v59 = vld [vmem:[%s4 + $0x8] sm:$0xff]
    %v60 = vld [vmem:[%s4 + $0x10] sm:$0xff]
    %v61 = vld [vmem:[%s5] sm:$0x1]
    %v63 = vperm.slane %v61, 0
    %vm65 = vcmask 195584
    %v67 = vsel %vm65, %v42, 0
    %v70 = vsel %vm65, %v43, 0
    %v73 = vsel %vm65, %v44, 0
    %v76 = vsel %vm65, %v45, 0
    %v79 = vsel %vm65, %v46, 0
    %v82 = vsel %vm65, %v47, 0
    %v85 = vsel %vm65, %v48, 0
    %v88 = vsel %vm65, %v49, 0
    %v91 = vsel %vm65, %v50, 0
    %v94 = vsel %vm65, %v51, 0
    %v97 = vsel %vm65, %v52, 0
    %v100 = vsel %vm65, %v53, 0
    %v103 = vsel %vm65, %v54, 0
    %v106 = vsel %vm65, %v55, 0
    %v109 = vsel %vm65, %v56, 0
    %v112 = vsel %vm65, %v57, 0
    %114 = vmatpush.msra.mxu0 0.0
    %115 = vmatpush.msra.mxu0 0.0
    %116 = vmatpush.msra.mxu0 0.0
    %117 = vmatpush.msra.mxu0 0.0
    %118 = vmatpush.msra.mxu0 0.0
    %119 = vmatpush.msra.mxu0 0.0
    %120 = vmatpush.msra.mxu0 0.0
    %121 = vmatpush.msra.mxu0 0.0
    %122 = vmatpush.msra.mxu0 0.0
    %123 = vmatpush.msra.mxu0 0.0
    %124 = vmatpush.msra.mxu0 0.0
    %125 = vmatpush.msra.mxu0 0.0
    %126 = vmatpush.msra.mxu0 0.0
    %127 = vmatpush.msra.mxu0 %v60
    %128 = vmatpush.msra.mxu0 %v59
    %129 = vmatpush.msra.mxu0 %v58
    %130 = vmatmul.f32.gmra.mxu0 %v67
    %v131 = vpop.f32.mrf.mxu0
    %v132 = vadd.f32 %v63, %v131
    %133 = vmatmul.f32.gmra.mxu0 %v70
    %v134 = vpop.f32.mrf.mxu0
    %v135 = vadd.f32 %v63, %v134
    %136 = vmatmul.f32.gmra.mxu0 %v73
    %v137 = vpop.f32.mrf.mxu0
    %v138 = vadd.f32 %v63, %v137
    %139 = vmatmul.f32.gmra.mxu0 %v76
    %v140 = vpop.f32.mrf.mxu0
    %v141 = vadd.f32 %v63, %v140
    %142 = vmatmul.f32.gmra.mxu0 %v79
    %v143 = vpop.f32.mrf.mxu0
    %v144 = vadd.f32 %v63, %v143
    %145 = vmatmul.f32.gmra.mxu0 %v82
    %v146 = vpop.f32.mrf.mxu0
    %v147 = vadd.f32 %v63, %v146
    %148 = vmatmul.f32.gmra.mxu0 %v85
    %v149 = vpop.f32.mrf.mxu0
    %v150 = vadd.f32 %v63, %v149
    %151 = vmatmul.f32.gmra.mxu0 %v88
    %v152 = vpop.f32.mrf.mxu0
    %v153 = vadd.f32 %v63, %v152
    %154 = vmatmul.f32.gmra.mxu0 %v91
    %v155 = vpop.f32.mrf.mxu0
    %v156 = vadd.f32 %v63, %v155
    %157 = vmatmul.f32.gmra.mxu0 %v94
    %v158 = vpop.f32.mrf.mxu0
    %v159 = vadd.f32 %v63, %v158
    %160 = vmatmul.f32.gmra.mxu0 %v97
    %v161 = vpop.f32.mrf.mxu0
    %v162 = vadd.f32 %v63, %v161
    %163 = vmatmul.f32.gmra.mxu0 %v100
    %v164 = vpop.f32.mrf.mxu0
    %v165 = vadd.f32 %v63, %v164
    %166 = vmatmul.f32.gmra.mxu0 %v103
    %v167 = vpop.f32.mrf.mxu0
    %v168 = vadd.f32 %v63, %v167
    %169 = vmatmul.f32.gmra.mxu0 %v106
    %v170 = vpop.f32.mrf.mxu0
    %v171 = vadd.f32 %v63, %v170
    %172 = vmatmul.f32.gmra.mxu0 %v109
    %v173 = vpop.f32.mrf.mxu0
    %v174 = vadd.f32 %v63, %v173
    %175 = vmatmul.f32.gmra.mxu0 %v112
    %v176 = vpop.f32.mrf.mxu0
    %v177 = vadd.f32 %v63, %v176
    %178 = vdwg.mxu0
    %vm179 = vcmp.gt.f32.partialorder %v132, 0.0
    %vm180 = vcmp.gt.f32.partialorder %v135, 0.0
    %vm181 = vcmp.gt.f32.partialorder %v138, 0.0
    %vm182 = vcmp.gt.f32.partialorder %v141, 0.0
    %vm183 = vcmp.gt.f32.partialorder %v144, 0.0
    %vm184 = vcmp.gt.f32.partialorder %v147, 0.0
    %vm185 = vcmp.gt.f32.partialorder %v150, 0.0
    %vm186 = vcmp.gt.f32.partialorder %v153, 0.0
    %vm187 = vcmp.gt.f32.partialorder %v156, 0.0
    %vm188 = vcmp.gt.f32.partialorder %v159, 0.0
    %vm189 = vcmp.gt.f32.partialorder %v162, 0.0
    %vm190 = vcmp.gt.f32.partialorder %v165, 0.0
    %vm191 = vcmp.gt.f32.partialorder %v168, 0.0
    %vm192 = vcmp.gt.f32.partialorder %v171, 0.0
    %vm193 = vcmp.gt.f32.partialorder %v174, 0.0
    %vm194 = vcmp.gt.f32.partialorder %v177, 0.0
    %v195 = vmul.f32 %v132, 1.442695
    %v196 = vpow.pop %v195
    %v197 = vmul.f32 %v135, 1.442695
    %v198 = vpow.pop %v197
    %v199 = vmul.f32 %v138, 1.442695
    %v200 = vpow.pop %v199
    %v201 = vmul.f32 %v141, 1.442695
    %v202 = vpow.pop %v201
    %v203 = vmul.f32 %v144, 1.442695
    %v204 = vpow.pop %v203
    %v205 = vmul.f32 %v147, 1.442695
    %v206 = vpow.pop %v205
    %v207 = vmul.f32 %v150, 1.442695
    %v208 = vpow.pop %v207
    %v209 = vmul.f32 %v153, 1.442695
    %v210 = vpow.pop %v209
    %v211 = vmul.f32 %v156, 1.442695
    %v212 = vpow.pop %v211
    %v213 = vmul.f32 %v159, 1.442695
    %v214 = vpow.pop %v213
    %v215 = vmul.f32 %v162, 1.442695
    %v216 = vpow.pop %v215
    %v217 = vmul.f32 %v165, 1.442695
    %v218 = vpow.pop %v217
    %v219 = vmul.f32 %v168, 1.442695
    %v220 = vpow.pop %v219
    %v221 = vmul.f32 %v171, 1.442695
    %v222 = vpow.pop %v221
    %v223 = vmul.f32 %v174, 1.442695
    %v224 = vpow.pop %v223
    %v225 = vmul.f32 %v177, 1.442695
    %v226 = vpow.pop %v225
    %v227 = vsub.f32 %v196, 1.0
    %v228 = vsub.f32 %v198, 1.0
    %v229 = vsub.f32 %v200, 1.0
    %v230 = vsub.f32 %v202, 1.0
    %v231 = vsub.f32 %v204, 1.0
    %v232 = vsub.f32 %v206, 1.0
    %v233 = vsub.f32 %v208, 1.0
    %v234 = vsub.f32 %v210, 1.0
    %v235 = vsub.f32 %v212, 1.0
    %v236 = vsub.f32 %v214, 1.0
    %v237 = vsub.f32 %v216, 1.0
    %v238 = vsub.f32 %v218, 1.0
    %v239 = vsub.f32 %v220, 1.0
    %v240 = vsub.f32 %v222, 1.0
    %v241 = vsub.f32 %v224, 1.0
    %v242 = vsub.f32 %v226, 1.0
    %v243 = vsel %vm179, %v132, %v227
    %v244 = vsel %vm180, %v135, %v228
    %v245 = vsel %vm181, %v138, %v229
    %v246 = vsel %vm182, %v141, %v230
    %v247 = vsel %vm183, %v144, %v231
    %v248 = vsel %vm184, %v147, %v232
    %v249 = vsel %vm185, %v150, %v233
    %v250 = vsel %vm186, %v153, %v234
    %v251 = vsel %vm187, %v156, %v235
    %v252 = vsel %vm188, %v159, %v236
    %v253 = vsel %vm189, %v162, %v237
    %v254 = vsel %vm190, %v165, %v238
    %v255 = vsel %vm191, %v168, %v239
    %v256 = vsel %vm192, %v171, %v240
    %v257 = vsel %vm193, %v174, %v241
    %v258 = vsel %vm194, %v177, %v242
    %v259 = vld [vmem:[%s6] sm:$0xff]
    %v260 = vld [vmem:[%s6 + $0x8] sm:$0xff]
    %v261 = vld [vmem:[%s6 + $0x10] sm:$0xff]
    %v262 = vld [vmem:[%s6 + $0x18] sm:$0xff]
    %v263 = vld [vmem:[%s6 + $0x20] sm:$0xff]
    %v264 = vld [vmem:[%s6 + $0x28] sm:$0xff]
    %v265 = vld [vmem:[%s6 + $0x30] sm:$0xff]
    %v266 = vld [vmem:[%s6 + $0x38] sm:$0xff]
    %v267 = vld [vmem:[%s6 + $0x40] sm:$0xff]
    %v268 = vld [vmem:[%s6 + $0x48] sm:$0xff]
    %v269 = vld [vmem:[%s6 + $0x50] sm:$0xff]
    %v270 = vld [vmem:[%s6 + $0x58] sm:$0xff]
    %v271 = vld [vmem:[%s6 + $0x60] sm:$0xff]
    %v272 = vld [vmem:[%s6 + $0x68] sm:$0xff]
    %v273 = vld [vmem:[%s6 + $0x70] sm:$0xff]
    %v274 = vld [vmem:[%s6 + $0x78] sm:$0xff]
    %v275 = vld [vmem:[%s7] sm:$0x1]
    %v277 = vperm.slane %v275, 0
    %279 = vmatpush.msra.mxu0 %v274
    %280 = vmatpush.msra.mxu0 %v273
    %281 = vmatpush.msra.mxu0 %v272
    %282 = vmatpush.msra.mxu0 %v271
    %283 = vmatpush.msra.mxu0 %v270
    %284 = vmatpush.msra.mxu0 %v269
    %285 = vmatpush.msra.mxu0 %v268
    %286 = vmatpush.msra.mxu0 %v267
    %287 = vmatpush.msra.mxu0 %v266
    %288 = vmatpush.msra.mxu0 %v265
    %289 = vmatpush.msra.mxu0 %v264
    %290 = vmatpush.msra.mxu0 %v263
    %291 = vmatpush.msra.mxu0 %v262
    %292 = vmatpush.msra.mxu0 %v261
    %293 = vmatpush.msra.mxu0 %v260
    %294 = vmatpush.msra.mxu0 %v259
    %295 = vmatmul.f32.gmra.mxu0 %v243
    %v296 = vpop.f32.mrf.mxu0
    %v297 = vadd.f32 %v277, %v296
    %298 = vmatmul.f32.gmra.mxu0 %v244
    %v299 = vpop.f32.mrf.mxu0
    %v300 = vadd.f32 %v277, %v299
    %301 = vmatmul.f32.gmra.mxu0 %v245
    %v302 = vpop.f32.mrf.mxu0
    %v303 = vadd.f32 %v277, %v302
    %304 = vmatmul.f32.gmra.mxu0 %v246
    %v305 = vpop.f32.mrf.mxu0
    %v306 = vadd.f32 %v277, %v305
    %307 = vmatmul.f32.gmra.mxu0 %v247
    %v308 = vpop.f32.mrf.mxu0
    %v309 = vadd.f32 %v277, %v308
    %310 = vmatmul.f32.gmra.mxu0 %v248
    %v311 = vpop.f32.mrf.mxu0
    %v312 = vadd.f32 %v277, %v311
    %313 = vmatmul.f32.gmra.mxu0 %v249
    %v314 = vpop.f32.mrf.mxu0
    %v315 = vadd.f32 %v277, %v314
    %316 = vmatmul.f32.gmra.mxu0 %v250
    %v317 = vpop.f32.mrf.mxu0
    %v318 = vadd.f32 %v277, %v317
    %319 = vmatmul.f32.gmra.mxu0 %v251
    %v320 = vpop.f32.mrf.mxu0
    %v321 = vadd.f32 %v277, %v320
    %322 = vmatmul.f32.gmra.mxu0 %v252
    %v323 = vpop.f32.mrf.mxu0
    %v324 = vadd.f32 %v277, %v323
    %325 = vmatmul.f32.gmra.mxu0 %v253
    %v326 = vpop.f32.mrf.mxu0
    %v327 = vadd.f32 %v277, %v326
    %328 = vmatmul.f32.gmra.mxu0 %v254
    %v329 = vpop.f32.mrf.mxu0
    %v330 = vadd.f32 %v277, %v329
    %331 = vmatmul.f32.gmra.mxu0 %v255
    %v332 = vpop.f32.mrf.mxu0
    %v333 = vadd.f32 %v277, %v332
    %334 = vmatmul.f32.gmra.mxu0 %v256
    %v335 = vpop.f32.mrf.mxu0
    %v336 = vadd.f32 %v277, %v335
    %337 = vmatmul.f32.gmra.mxu0 %v257
    %v338 = vpop.f32.mrf.mxu0
    %v339 = vadd.f32 %v277, %v338
    %340 = vmatmul.f32.gmra.mxu0 %v258
    %v341 = vpop.f32.mrf.mxu0
    %v342 = vadd.f32 %v277, %v341
    %343 = vdwg.mxu0
    %vm344 = vcmp.gt.f32.partialorder %v297, 0.0
    %vm345 = vcmp.gt.f32.partialorder %v300, 0.0
    %vm346 = vcmp.gt.f32.partialorder %v303, 0.0
    %vm347 = vcmp.gt.f32.partialorder %v306, 0.0
    %vm348 = vcmp.gt.f32.partialorder %v309, 0.0
    %vm349 = vcmp.gt.f32.partialorder %v312, 0.0
    %vm350 = vcmp.gt.f32.partialorder %v315, 0.0
    %vm351 = vcmp.gt.f32.partialorder %v318, 0.0
    %vm352 = vcmp.gt.f32.partialorder %v321, 0.0
    %vm353 = vcmp.gt.f32.partialorder %v324, 0.0
    %vm354 = vcmp.gt.f32.partialorder %v327, 0.0
    %vm355 = vcmp.gt.f32.partialorder %v330, 0.0
    %vm356 = vcmp.gt.f32.partialorder %v333, 0.0
    %vm357 = vcmp.gt.f32.partialorder %v336, 0.0
    %vm358 = vcmp.gt.f32.partialorder %v339, 0.0
    %vm359 = vcmp.gt.f32.partialorder %v342, 0.0
    %v360 = vmul.f32 %v297, 1.442695
    %v361 = vpow.pop %v360
    %v362 = vmul.f32 %v300, 1.442695
    %v363 = vpow.pop %v362
    %v364 = vmul.f32 %v303, 1.442695
    %v365 = vpow.pop %v364
    %v366 = vmul.f32 %v306, 1.442695
    %v367 = vpow.pop %v366
    %v368 = vmul.f32 %v309, 1.442695
    %v369 = vpow.pop %v368
    %v370 = vmul.f32 %v312, 1.442695
    %v371 = vpow.pop %v370
    %v372 = vmul.f32 %v315, 1.442695
    %v373 = vpow.pop %v372
    %v374 = vmul.f32 %v318, 1.442695
    %v375 = vpow.pop %v374
    %v376 = vmul.f32 %v321, 1.442695
    %v377 = vpow.pop %v376
    %v378 = vmul.f32 %v324, 1.442695
    %v379 = vpow.pop %v378
    %v380 = vmul.f32 %v327, 1.442695
    %v381 = vpow.pop %v380
    %v382 = vmul.f32 %v330, 1.442695
    %v383 = vpow.pop %v382
    %v384 = vmul.f32 %v333, 1.442695
    %v385 = vpow.pop %v384
    %v386 = vmul.f32 %v336, 1.442695
    %v387 = vpow.pop %v386
    %v388 = vmul.f32 %v339, 1.442695
    %v389 = vpow.pop %v388
    %v390 = vmul.f32 %v342, 1.442695
    %v391 = vpow.pop %v390
    %v392 = vsub.f32 %v361, 1.0
    %v393 = vsub.f32 %v363, 1.0
    %v394 = vsub.f32 %v365, 1.0
    %v395 = vsub.f32 %v367, 1.0
    %v396 = vsub.f32 %v369, 1.0
    %v397 = vsub.f32 %v371, 1.0
    %v398 = vsub.f32 %v373, 1.0
    %v399 = vsub.f32 %v375, 1.0
    %v400 = vsub.f32 %v377, 1.0
    %v401 = vsub.f32 %v379, 1.0
    %v402 = vsub.f32 %v381, 1.0
    %v403 = vsub.f32 %v383, 1.0
    %v404 = vsub.f32 %v385, 1.0
    %v405 = vsub.f32 %v387, 1.0
    %v406 = vsub.f32 %v389, 1.0
    %v407 = vsub.f32 %v391, 1.0
    %v408 = vsel %vm344, %v297, %v392
    %v409 = vsel %vm345, %v300, %v393
    %v410 = vsel %vm346, %v303, %v394
    %v411 = vsel %vm347, %v306, %v395
    %v412 = vsel %vm348, %v309, %v396
    %v413 = vsel %vm349, %v312, %v397
    %v414 = vsel %vm350, %v315, %v398
    %v415 = vsel %vm351, %v318, %v399
    %v416 = vsel %vm352, %v321, %v400
    %v417 = vsel %vm353, %v324, %v401
    %v418 = vsel %vm354, %v327, %v402
    %v419 = vsel %vm355, %v330, %v403
    %v420 = vsel %vm356, %v333, %v404
    %v421 = vsel %vm357, %v336, %v405
    %v422 = vsel %vm358, %v339, %v406
    %v423 = vsel %vm359, %v342, %v407
    %v424 = vld [vmem:[%s8] sm:$0xff]
    %v425 = vld [vmem:[%s8 + $0x8] sm:$0xff]
    %v426 = vld [vmem:[%s8 + $0x10] sm:$0xff]
    %v427 = vld [vmem:[%s8 + $0x18] sm:$0xff]
    %v428 = vld [vmem:[%s8 + $0x20] sm:$0xff]
    %v429 = vld [vmem:[%s8 + $0x28] sm:$0xff]
    %v430 = vld [vmem:[%s8 + $0x30] sm:$0xff]
    %v431 = vld [vmem:[%s8 + $0x38] sm:$0xff]
    %v432 = vld [vmem:[%s8 + $0x40] sm:$0xff]
    %v433 = vld [vmem:[%s8 + $0x48] sm:$0xff]
    %v434 = vld [vmem:[%s8 + $0x50] sm:$0xff]
    %v435 = vld [vmem:[%s8 + $0x58] sm:$0xff]
    %v436 = vld [vmem:[%s8 + $0x60] sm:$0xff]
    %v437 = vld [vmem:[%s8 + $0x68] sm:$0xff]
    %v438 = vld [vmem:[%s8 + $0x70] sm:$0xff]
    %v439 = vld [vmem:[%s8 + $0x78] sm:$0xff]
    %v440 = vld [vmem:[%s9] sm:$0x1]
    %v442 = vperm.slane %v440, 0
    %444 = vmatpush.msra.mxu0 %v439
    %445 = vmatpush.msra.mxu0 %v438
    %446 = vmatpush.msra.mxu0 %v437
    %447 = vmatpush.msra.mxu0 %v436
    %448 = vmatpush.msra.mxu0 %v435
    %449 = vmatpush.msra.mxu0 %v434
    %450 = vmatpush.msra.mxu0 %v433
    %451 = vmatpush.msra.mxu0 %v432
    %452 = vmatpush.msra.mxu0 %v431
    %453 = vmatpush.msra.mxu0 %v430
    %454 = vmatpush.msra.mxu0 %v429
    %455 = vmatpush.msra.mxu0 %v428
    %456 = vmatpush.msra.mxu0 %v427
    %457 = vmatpush.msra.mxu0 %v426
    %458 = vmatpush.msra.mxu0 %v425
    %459 = vmatpush.msra.mxu0 %v424
    %460 = vmatmul.f32.gmra.mxu0 %v408
    %v461 = vpop.f32.mrf.mxu0
    %v462 = vadd.f32 %v442, %v461
    %463 = vmatmul.f32.gmra.mxu0 %v409
    %v464 = vpop.f32.mrf.mxu0
    %v465 = vadd.f32 %v442, %v464
    %466 = vmatmul.f32.gmra.mxu0 %v410
    %v467 = vpop.f32.mrf.mxu0
    %v468 = vadd.f32 %v442, %v467
    %469 = vmatmul.f32.gmra.mxu0 %v411
    %v470 = vpop.f32.mrf.mxu0
    %v471 = vadd.f32 %v442, %v470
    %472 = vmatmul.f32.gmra.mxu0 %v412
    %v473 = vpop.f32.mrf.mxu0
    %v474 = vadd.f32 %v442, %v473
    %475 = vmatmul.f32.gmra.mxu0 %v413
    %v476 = vpop.f32.mrf.mxu0
    %v477 = vadd.f32 %v442, %v476
    %478 = vmatmul.f32.gmra.mxu0 %v414
    %v479 = vpop.f32.mrf.mxu0
    %v480 = vadd.f32 %v442, %v479
    %481 = vmatmul.f32.gmra.mxu0 %v415
    %v482 = vpop.f32.mrf.mxu0
    %v483 = vadd.f32 %v442, %v482
    %484 = vmatmul.f32.gmra.mxu0 %v416
    %v485 = vpop.f32.mrf.mxu0
    %v486 = vadd.f32 %v442, %v485
    %487 = vmatmul.f32.gmra.mxu0 %v417
    %v488 = vpop.f32.mrf.mxu0
    %v489 = vadd.f32 %v442, %v488
    %490 = vmatmul.f32.gmra.mxu0 %v418
    %v491 = vpop.f32.mrf.mxu0
    %v492 = vadd.f32 %v442, %v491
    %493 = vmatmul.f32.gmra.mxu0 %v419
    %v494 = vpop.f32.mrf.mxu0
    %v495 = vadd.f32 %v442, %v494
    %496 = vmatmul.f32.gmra.mxu0 %v420
    %v497 = vpop.f32.mrf.mxu0
    %v498 = vadd.f32 %v442, %v497
    %499 = vmatmul.f32.gmra.mxu0 %v421
    %v500 = vpop.f32.mrf.mxu0
    %v501 = vadd.f32 %v442, %v500
    %502 = vmatmul.f32.gmra.mxu0 %v422
    %v503 = vpop.f32.mrf.mxu0
    %v504 = vadd.f32 %v442, %v503
    %505 = vmatmul.f32.gmra.mxu0 %v423
    %v506 = vpop.f32.mrf.mxu0
    %v507 = vadd.f32 %v442, %v506
    %508 = vdwg.mxu0
    %vm509 = vcmp.gt.f32.partialorder %v462, 0.0
    %vm510 = vcmp.gt.f32.partialorder %v465, 0.0
    %vm511 = vcmp.gt.f32.partialorder %v468, 0.0
    %vm512 = vcmp.gt.f32.partialorder %v471, 0.0
    %vm513 = vcmp.gt.f32.partialorder %v474, 0.0
    %vm514 = vcmp.gt.f32.partialorder %v477, 0.0
    %vm515 = vcmp.gt.f32.partialorder %v480, 0.0
    %vm516 = vcmp.gt.f32.partialorder %v483, 0.0
    %vm517 = vcmp.gt.f32.partialorder %v486, 0.0
    %vm518 = vcmp.gt.f32.partialorder %v489, 0.0
    %vm519 = vcmp.gt.f32.partialorder %v492, 0.0
    %vm520 = vcmp.gt.f32.partialorder %v495, 0.0
    %vm521 = vcmp.gt.f32.partialorder %v498, 0.0
    %vm522 = vcmp.gt.f32.partialorder %v501, 0.0
    %vm523 = vcmp.gt.f32.partialorder %v504, 0.0
    %vm524 = vcmp.gt.f32.partialorder %v507, 0.0
    %v525 = vmul.f32 %v462, 1.442695
    %v526 = vpow.pop %v525
    %v527 = vmul.f32 %v465, 1.442695
    %v528 = vpow.pop %v527
    %v529 = vmul.f32 %v468, 1.442695
    %v530 = vpow.pop %v529
    %v531 = vmul.f32 %v471, 1.442695
    %v532 = vpow.pop %v531
    %v533 = vmul.f32 %v474, 1.442695
    %v534 = vpow.pop %v533
    %v535 = vmul.f32 %v477, 1.442695
    %v536 = vpow.pop %v535
    %v537 = vmul.f32 %v480, 1.442695
    %v538 = vpow.pop %v537
    %v539 = vmul.f32 %v483, 1.442695
    %v540 = vpow.pop %v539
    %v541 = vmul.f32 %v486, 1.442695
    %v542 = vpow.pop %v541
    %v543 = vmul.f32 %v489, 1.442695
    %v544 = vpow.pop %v543
    %v545 = vmul.f32 %v492, 1.442695
    %v546 = vpow.pop %v545
    %v547 = vmul.f32 %v495, 1.442695
    %v548 = vpow.pop %v547
    %v549 = vmul.f32 %v498, 1.442695
    %v550 = vpow.pop %v549
    %v551 = vmul.f32 %v501, 1.442695
    %v552 = vpow.pop %v551
    %v553 = vmul.f32 %v504, 1.442695
    %v554 = vpow.pop %v553
    %v555 = vmul.f32 %v507, 1.442695
    %v556 = vpow.pop %v555
    %v557 = vsub.f32 %v526, 1.0
    %v558 = vsub.f32 %v528, 1.0
    %v559 = vsub.f32 %v530, 1.0
    %v560 = vsub.f32 %v532, 1.0
    %v561 = vsub.f32 %v534, 1.0
    %v562 = vsub.f32 %v536, 1.0
    %v563 = vsub.f32 %v538, 1.0
    %v564 = vsub.f32 %v540, 1.0
    %v565 = vsub.f32 %v542, 1.0
    %v566 = vsub.f32 %v544, 1.0
    %v567 = vsub.f32 %v546, 1.0
    %v568 = vsub.f32 %v548, 1.0
    %v569 = vsub.f32 %v550, 1.0
    %v570 = vsub.f32 %v552, 1.0
    %v571 = vsub.f32 %v554, 1.0
    %v572 = vsub.f32 %v556, 1.0
    %v573 = vsel %vm509, %v462, %v557
    %v574 = vsel %vm510, %v465, %v558
    %v575 = vsel %vm511, %v468, %v559
    %v576 = vsel %vm512, %v471, %v560
    %v577 = vsel %vm513, %v474, %v561
    %v578 = vsel %vm514, %v477, %v562
    %v579 = vsel %vm515, %v480, %v563
    %v580 = vsel %vm516, %v483, %v564
    %v581 = vsel %vm517, %v486, %v565
    %v582 = vsel %vm518, %v489, %v566
    %v583 = vsel %vm519, %v492, %v567
    %v584 = vsel %vm520, %v495, %v568
    %v585 = vsel %vm521, %v498, %v569
    %v586 = vsel %vm522, %v501, %v570
    %v587 = vsel %vm523, %v504, %v571
    %v588 = vsel %vm524, %v507, %v572
    %v589 = vld [vmem:[%s10] sm:$0xff]
    %v590 = vld [vmem:[%s10 + $0x8] sm:$0xff]
    %v591 = vld [vmem:[%s10 + $0x10] sm:$0xff]
    %v592 = vld [vmem:[%s10 + $0x18] sm:$0xff]
    %v593 = vld [vmem:[%s10 + $0x20] sm:$0xff]
    %v594 = vld [vmem:[%s10 + $0x28] sm:$0xff]
    %v595 = vld [vmem:[%s10 + $0x30] sm:$0xff]
    %v596 = vld [vmem:[%s10 + $0x38] sm:$0xff]
    %v597 = vld [vmem:[%s10 + $0x40] sm:$0xff]
    %v598 = vld [vmem:[%s10 + $0x48] sm:$0xff]
    %v599 = vld [vmem:[%s10 + $0x50] sm:$0xff]
    %v600 = vld [vmem:[%s10 + $0x58] sm:$0xff]
    %v601 = vld [vmem:[%s10 + $0x60] sm:$0xff]
    %v602 = vld [vmem:[%s10 + $0x68] sm:$0xff]
    %v603 = vld [vmem:[%s10 + $0x70] sm:$0xff]
    %v604 = vld [vmem:[%s10 + $0x78] sm:$0xff]
    %v605 = vld [vmem:[%s11] sm:$0x1]
    %v607 = vperm.slane %v605, 0
    %609 = vmatpush.msra.mxu0 %v604
    %610 = vmatpush.msra.mxu0 %v603
    %611 = vmatpush.msra.mxu0 %v602
    %612 = vmatpush.msra.mxu0 %v601
    %613 = vmatpush.msra.mxu0 %v600
    %614 = vmatpush.msra.mxu0 %v599
    %615 = vmatpush.msra.mxu0 %v598
    %616 = vmatpush.msra.mxu0 %v597
    %617 = vmatpush.msra.mxu0 %v596
    %618 = vmatpush.msra.mxu0 %v595
    %619 = vmatpush.msra.mxu0 %v594
    %620 = vmatpush.msra.mxu0 %v593
    %621 = vmatpush.msra.mxu0 %v592
    %622 = vmatpush.msra.mxu0 %v591
    %623 = vmatpush.msra.mxu0 %v590
    %624 = vmatpush.msra.mxu0 %v589
    %625 = vmatmul.f32.gmra.mxu0 %v573
    %v626 = vpop.f32.mrf.mxu0
    %v627 = vadd.f32 %v607, %v626
    %628 = vmatmul.f32.gmra.mxu0 %v574
    %v629 = vpop.f32.mrf.mxu0
    %v630 = vadd.f32 %v607, %v629
    %631 = vmatmul.f32.gmra.mxu0 %v575
    %v632 = vpop.f32.mrf.mxu0
    %v633 = vadd.f32 %v607, %v632
    %634 = vmatmul.f32.gmra.mxu0 %v576
    %v635 = vpop.f32.mrf.mxu0
    %v636 = vadd.f32 %v607, %v635
    %637 = vmatmul.f32.gmra.mxu0 %v577
    %v638 = vpop.f32.mrf.mxu0
    %v639 = vadd.f32 %v607, %v638
    %640 = vmatmul.f32.gmra.mxu0 %v578
    %v641 = vpop.f32.mrf.mxu0
    %v642 = vadd.f32 %v607, %v641
    %643 = vmatmul.f32.gmra.mxu0 %v579
    %v644 = vpop.f32.mrf.mxu0
    %v645 = vadd.f32 %v607, %v644
    %646 = vmatmul.f32.gmra.mxu0 %v580
    %v647 = vpop.f32.mrf.mxu0
    %v648 = vadd.f32 %v607, %v647
    %649 = vmatmul.f32.gmra.mxu0 %v581
    %v650 = vpop.f32.mrf.mxu0
    %v651 = vadd.f32 %v607, %v650
    %652 = vmatmul.f32.gmra.mxu0 %v582
    %v653 = vpop.f32.mrf.mxu0
    %v654 = vadd.f32 %v607, %v653
    %655 = vmatmul.f32.gmra.mxu0 %v583
    %v656 = vpop.f32.mrf.mxu0
    %v657 = vadd.f32 %v607, %v656
    %658 = vmatmul.f32.gmra.mxu0 %v584
    %v659 = vpop.f32.mrf.mxu0
    %v660 = vadd.f32 %v607, %v659
    %661 = vmatmul.f32.gmra.mxu0 %v585
    %v662 = vpop.f32.mrf.mxu0
    %v663 = vadd.f32 %v607, %v662
    %664 = vmatmul.f32.gmra.mxu0 %v586
    %v665 = vpop.f32.mrf.mxu0
    %v666 = vadd.f32 %v607, %v665
    %667 = vmatmul.f32.gmra.mxu0 %v587
    %v668 = vpop.f32.mrf.mxu0
    %v669 = vadd.f32 %v607, %v668
    %670 = vmatmul.f32.gmra.mxu0 %v588
    %v671 = vpop.f32.mrf.mxu0
    %v672 = vadd.f32 %v607, %v671
    %673 = vdwg.mxu0
    %v674 = vmax.f32 %v627, -1.0
    %v675 = vmax.f32 %v630, -1.0
    %v676 = vmax.f32 %v633, -1.0
    %v677 = vmax.f32 %v636, -1.0
    %v678 = vmax.f32 %v639, -1.0
    %v679 = vmax.f32 %v642, -1.0
    %v680 = vmax.f32 %v645, -1.0
    %v681 = vmax.f32 %v648, -1.0
    %v682 = vmax.f32 %v651, -1.0
    %v683 = vmax.f32 %v654, -1.0
    %v684 = vmax.f32 %v657, -1.0
    %v685 = vmax.f32 %v660, -1.0
    %v686 = vmax.f32 %v663, -1.0
    %v687 = vmax.f32 %v666, -1.0
    %v688 = vmax.f32 %v669, -1.0
    %v689 = vmax.f32 %v672, -1.0
    %v690 = vmin.f32 %v674, 1.0
    %v691 = vmin.f32 %v675, 1.0
    %v692 = vmin.f32 %v676, 1.0
    %v693 = vmin.f32 %v677, 1.0
    %v694 = vmin.f32 %v678, 1.0
    %v695 = vmin.f32 %v679, 1.0
    %v696 = vmin.f32 %v680, 1.0
    %v697 = vmin.f32 %v681, 1.0
    %v698 = vmin.f32 %v682, 1.0
    %v699 = vmin.f32 %v683, 1.0
    %v700 = vmin.f32 %v684, 1.0
    %v701 = vmin.f32 %v685, 1.0
    %v702 = vmin.f32 %v686, 1.0
    %v703 = vmin.f32 %v687, 1.0
    %v704 = vmin.f32 %v688, 1.0
    %v705 = vmin.f32 %v689, 1.0
    %v706 = vld [vmem:[%s1] sm:$0xff]
    %v707 = vld [vmem:[%s1 + $0x8] sm:$0xff]
    %v708 = vld [vmem:[%s1 + $0x10] sm:$0xff]
    %v709 = vld [vmem:[%s1 + $0x18] sm:$0xff]
    %v710 = vld [vmem:[%s1 + $0x20] sm:$0xff]
    %v711 = vld [vmem:[%s1 + $0x28] sm:$0xff]
    %v712 = vld [vmem:[%s1 + $0x30] sm:$0xff]
    %v713 = vld [vmem:[%s1 + $0x38] sm:$0xff]
    %v714 = vld [vmem:[%s1 + $0x40] sm:$0xff]
    %v715 = vld [vmem:[%s1 + $0x48] sm:$0xff]
    %v716 = vld [vmem:[%s1 + $0x50] sm:$0xff]
    %v717 = vld [vmem:[%s1 + $0x58] sm:$0xff]
    %v718 = vld [vmem:[%s1 + $0x60] sm:$0xff]
    %v719 = vld [vmem:[%s1 + $0x68] sm:$0xff]
    %v720 = vld [vmem:[%s1 + $0x70] sm:$0xff]
    %v721 = vld [vmem:[%s1 + $0x78] sm:$0xff]
    %v722 = vsub.f32 %v706, %v690
    %v723 = vsub.f32 %v707, %v691
    %v724 = vsub.f32 %v708, %v692
    %v725 = vsub.f32 %v709, %v693
    %v726 = vsub.f32 %v710, %v694
    %v727 = vsub.f32 %v711, %v695
    %v728 = vsub.f32 %v712, %v696
    %v729 = vsub.f32 %v713, %v697
    %v730 = vsub.f32 %v714, %v698
    %v731 = vsub.f32 %v715, %v699
    %v732 = vsub.f32 %v716, %v700
    %v733 = vsub.f32 %v717, %v701
    %v734 = vsub.f32 %v718, %v702
    %v735 = vsub.f32 %v719, %v703
    %v736 = vsub.f32 %v720, %v704
    %v737 = vsub.f32 %v721, %v705
    %v738 = vld [vmem:[%s2] sm:$0x1]
    %v740 = vperm.slane %v738, 0
    %v742 = vmul.f32 %v722, %v740
    %v743 = vmul.f32 %v723, %v740
    %v744 = vmul.f32 %v724, %v740
    %v745 = vmul.f32 %v725, %v740
    %v746 = vmul.f32 %v726, %v740
    %v747 = vmul.f32 %v727, %v740
    %v748 = vmul.f32 %v728, %v740
    %v749 = vmul.f32 %v729, %v740
    %v750 = vmul.f32 %v730, %v740
    %v751 = vmul.f32 %v731, %v740
    %v752 = vmul.f32 %v732, %v740
    %v753 = vmul.f32 %v733, %v740
    %v754 = vmul.f32 %v734, %v740
    %v755 = vmul.f32 %v735, %v740
    %v756 = vmul.f32 %v736, %v740
    %v757 = vmul.f32 %v737, %v740
    %v758 = vmul.f32 %v742, -0.5
    %v759 = vmul.f32 %v743, -0.5
    %v760 = vmul.f32 %v744, -0.5
    %v761 = vmul.f32 %v745, -0.5
    %v762 = vmul.f32 %v746, -0.5
    %v763 = vmul.f32 %v747, -0.5
    %v764 = vmul.f32 %v748, -0.5
    %v765 = vmul.f32 %v749, -0.5
    %v766 = vmul.f32 %v750, -0.5
    %v767 = vmul.f32 %v751, -0.5
    %v768 = vmul.f32 %v752, -0.5
    %v769 = vmul.f32 %v753, -0.5
    %v770 = vmul.f32 %v754, -0.5
    %v771 = vmul.f32 %v755, -0.5
    %v772 = vmul.f32 %v756, -0.5
    %v773 = vmul.f32 %v757, -0.5
    %v774 = vmul.f32 %v758, %v742
    %v775 = vmul.f32 %v759, %v743
    %v776 = vmul.f32 %v760, %v744
    %v777 = vmul.f32 %v761, %v745
    %v778 = vmul.f32 %v762, %v746
    %v779 = vmul.f32 %v763, %v747
    %v780 = vmul.f32 %v764, %v748
    %v781 = vmul.f32 %v765, %v749
    %v782 = vmul.f32 %v766, %v750
    %v783 = vmul.f32 %v767, %v751
    %v784 = vmul.f32 %v768, %v752
    %v785 = vmul.f32 %v769, %v753
    %v786 = vmul.f32 %v770, %v754
    %v787 = vmul.f32 %v771, %v755
    %v788 = vmul.f32 %v772, %v756
    %v789 = vmul.f32 %v773, %v757
    %v790 = vld [vmem:[%s3] sm:$0x1]
    %v792 = vperm.slane %v790, 0
    %v794 = vadd.f32 %v774, %v792
    %v795 = vadd.f32 %v775, %v792
    %v796 = vadd.f32 %v776, %v792
    %v797 = vadd.f32 %v777, %v792
    %v798 = vadd.f32 %v778, %v792
    %v799 = vadd.f32 %v779, %v792
    %v800 = vadd.f32 %v780, %v792
    %v801 = vadd.f32 %v781, %v792
    %v802 = vadd.f32 %v782, %v792
    %v803 = vadd.f32 %v783, %v792
    %v804 = vadd.f32 %v784, %v792
    %v805 = vadd.f32 %v785, %v792
    %v806 = vadd.f32 %v786, %v792
    %v807 = vadd.f32 %v787, %v792
    %v808 = vadd.f32 %v788, %v792
    %v809 = vadd.f32 %v789, %v792
    %vm810 = vcmask 64512
    %v811 = vsel %vm810, %v794, 0.0
    %812 = vadd.xlane.f32.xlu0 %v811
    %v813 = vpop.xlane.xlu0 %812
    %v814 = vsel %vm810, %v795, 0.0
    %815 = vadd.xlane.f32.xlu0 %v814
    %v816 = vpop.xlane.xlu0 %815
    %v817 = vsel %vm810, %v796, 0.0
    %818 = vadd.xlane.f32.xlu0 %v817
    %v819 = vpop.xlane.xlu0 %818
    %v820 = vsel %vm810, %v797, 0.0
    %821 = vadd.xlane.f32.xlu0 %v820
    %v822 = vpop.xlane.xlu0 %821
    %v823 = vsel %vm810, %v798, 0.0
    %824 = vadd.xlane.f32.xlu0 %v823
    %v825 = vpop.xlane.xlu0 %824
    %v826 = vsel %vm810, %v799, 0.0
    %827 = vadd.xlane.f32.xlu0 %v826
    %v828 = vpop.xlane.xlu0 %827
    %v829 = vsel %vm810, %v800, 0.0
    %830 = vadd.xlane.f32.xlu0 %v829
    %v831 = vpop.xlane.xlu0 %830
    %v832 = vsel %vm810, %v801, 0.0
    %833 = vadd.xlane.f32.xlu0 %v832
    %v834 = vpop.xlane.xlu0 %833
    %v835 = vsel %vm810, %v802, 0.0
    %836 = vadd.xlane.f32.xlu0 %v835
    %v837 = vpop.xlane.xlu0 %836
    %v838 = vsel %vm810, %v803, 0.0
    %839 = vadd.xlane.f32.xlu0 %v838
    %v840 = vpop.xlane.xlu0 %839
    %v841 = vsel %vm810, %v804, 0.0
    %842 = vadd.xlane.f32.xlu0 %v841
    %v843 = vpop.xlane.xlu0 %842
    %v844 = vsel %vm810, %v805, 0.0
    %845 = vadd.xlane.f32.xlu0 %v844
    %v846 = vpop.xlane.xlu0 %845
    %v847 = vsel %vm810, %v806, 0.0
    %848 = vadd.xlane.f32.xlu0 %v847
    %v849 = vpop.xlane.xlu0 %848
    %v850 = vsel %vm810, %v807, 0.0
    %851 = vadd.xlane.f32.xlu0 %v850
    %v852 = vpop.xlane.xlu0 %851
    %v853 = vsel %vm810, %v808, 0.0
    %854 = vadd.xlane.f32.xlu0 %v853
    %v855 = vpop.xlane.xlu0 %854
    %v856 = vsel %vm810, %v809, 0.0
    %857 = vadd.xlane.f32.xlu0 %v856
    %v858 = vpop.xlane.xlu0 %857
    %875 = vrot.lane.b32.xlu0 %v627, 121
    %v876 = vpop.permute.xlu0 %875
    %877 = vrot.lane.b32.xlu0 %v630, 121
    %v878 = vpop.permute.xlu0 %877
    %879 = vrot.lane.b32.xlu0 %v633, 121
    %v880 = vpop.permute.xlu0 %879
    %881 = vrot.lane.b32.xlu0 %v636, 121
    %v882 = vpop.permute.xlu0 %881
    %883 = vrot.lane.b32.xlu0 %v639, 121
    %v884 = vpop.permute.xlu0 %883
    %885 = vrot.lane.b32.xlu0 %v642, 121
    %v886 = vpop.permute.xlu0 %885
    %887 = vrot.lane.b32.xlu0 %v645, 121
    %v888 = vpop.permute.xlu0 %887
    %889 = vrot.lane.b32.xlu0 %v648, 121
    %v890 = vpop.permute.xlu0 %889
    %891 = vrot.lane.b32.xlu0 %v651, 121
    %v892 = vpop.permute.xlu0 %891
    %893 = vrot.lane.b32.xlu0 %v654, 121
    %v894 = vpop.permute.xlu0 %893
    %895 = vrot.lane.b32.xlu0 %v657, 121
    %v896 = vpop.permute.xlu0 %895
    %897 = vrot.lane.b32.xlu0 %v660, 121
    %v898 = vpop.permute.xlu0 %897
    %899 = vrot.lane.b32.xlu0 %v663, 121
    %v900 = vpop.permute.xlu0 %899
    %901 = vrot.lane.b32.xlu0 %v666, 121
    %v902 = vpop.permute.xlu0 %901
    %903 = vrot.lane.b32.xlu0 %v669, 121
    %v904 = vpop.permute.xlu0 %903
    %905 = vrot.lane.b32.xlu0 %v672, 121
    %v906 = vpop.permute.xlu0 %905
    %vm923 = vcmask 7168
    %v924 = vsel %vm923, %v813, %v876
    %v925 = vsel %vm923, %v816, %v878
    %v926 = vsel %vm923, %v819, %v880
    %v927 = vsel %vm923, %v822, %v882
    %v928 = vsel %vm923, %v825, %v884
    %v929 = vsel %vm923, %v828, %v886
    %v930 = vsel %vm923, %v831, %v888
    %v931 = vsel %vm923, %v834, %v890
    %v932 = vsel %vm923, %v837, %v892
    %v933 = vsel %vm923, %v840, %v894
    %v934 = vsel %vm923, %v843, %v896
    %v935 = vsel %vm923, %v846, %v898
    %v936 = vsel %vm923, %v849, %v900
    %v937 = vsel %vm923, %v852, %v902
    %v938 = vsel %vm923, %v855, %v904
    %v939 = vsel %vm923, %v858, %v906
    %940 = vxpose.xlu0.b32.start [1/16] %v924, 128
    %941 = vxpose.xlu0.b32.cont [2/16] %v925, 128
    %942 = vxpose.xlu0.b32.cont [3/16] %v926, 128
    %943 = vxpose.xlu0.b32.cont [4/16] %v927, 128
    %944 = vxpose.xlu0.b32.cont [5/16] %v928, 128
    %945 = vxpose.xlu0.b32.cont [6/16] %v929, 128
    %946 = vxpose.xlu0.b32.cont [7/16] %v930, 128
    %947 = vxpose.xlu0.b32.cont [8/16] %v931, 128
    %948 = vxpose.xlu0.b32.cont [9/16] %v932, 128
    %949 = vxpose.xlu0.b32.cont [10/16] %v933, 128
    %950 = vxpose.xlu0.b32.cont [11/16] %v934, 128
    %951 = vxpose.xlu0.b32.cont [12/16] %v935, 128
    %952 = vxpose.xlu0.b32.cont [13/16] %v936, 128
    %953 = vxpose.xlu0.b32.cont [14/16] %v937, 128
    %954 = vxpose.xlu0.b32.cont [15/16] %v938, 128
    %955 = vxpose.xlu0.b32.end [16/16] %v939, 128
    %v956 = vpop.trf.xlu0
    %v957 = vpop.trf.xlu0
    %v958 = vpop.trf.xlu0
    %v959 = vpop.trf.xlu0
    %v960 = vpop.trf.xlu0
    %v961 = vpop.trf.xlu0
    %v962 = vpop.trf.xlu0
    %v963 = vpop.trf.xlu0
    %v964 = vpop.trf.xlu0
    %v965 = vpop.trf.xlu0
    %v966 = vpop.trf.xlu0
    %v967 = vpop.trf.xlu0
    %v968 = vpop.trf.xlu0
    %v969 = vpop.trf.xlu0
    %v970 = vpop.trf.xlu0
    %v971 = vpop.trf.xlu0
    %972 = vst [vmem:[#allocation2] sm:$0x3] %v956
    // Predicated region
    $region50: #{tpu_custom_call.1} parent=1 // pred_check
      _
    $region51: #{tpu_custom_call.1} parent=1 // pred_check_branch
      %974 = sbr.rel (0) target = $region53
    $region52: #{tpu_custom_call.1} parent=1 // pred_region
      %976 = vsyncadd [#allocation3], 0
      %s978 = sshll.u32 [#allocation2], 4
      %s979 = int_to_ptr.vmem [resolvable:$true] %s978
      %s980 = sshll.u32 %s12, 4
      %s981 = int_to_ptr.hbm [resolvable:$true] %s980
      %983 = dma.vmem_to_hbm [thread:$0]  %s979, 32, %s981, [#allocation3]
    $region53: #{tpu_custom_call.1} parent=1 // pred_fallthru
      _
    // Predicated region
    $region54: #{tpu_custom_call.1} parent=1 // pred_check
      _
    $region55: #{tpu_custom_call.1} parent=1 // pred_check_branch
      %985 = sbr.rel (0) target = $region57
    $region56: #{tpu_custom_call.1} parent=1 // pred_region
      %987 = dma.done [#allocation3], 32
    $region57: #{tpu_custom_call.1} parent=1 // pred_fallthru
      _
    %988 = vsyncpa [#allocation3], 1

</llo_original>
